<compile_context>
chip_gen: v7x
topology: tpu7x:2x2x1
jax: 0.10.0
libtpu: 0.0.40
codegen_flags: <defaults>
</compile_context>

<pallas_src>
import functools

import jax
import jax.numpy as jnp
from jax import lax
from jax.experimental import pallas as pl
from jax.experimental.pallas import tpu as pltpu


def _detect_kernel(x_ref, tapmask_ref, w1_ref, shift_ref, w2_ref, b2_ref,
                   sigmask_ref, o_ref, *, S, L):
    """Transposed (spatial-on-lanes) Detect head for one batch block.

    x_ref:       (C, L)       flattened input, L = Bt*S*S on the lane axis
    tapmask_ref: (9, L)       per-tap validity mask (implements zero padding)
    w1_ref:      (C2, 9*C)    3x3 conv weights, BN scale folded, im2col layout
    shift_ref:   (C2, 1)      fused BN shift
    w2_ref:      (OUT, C2)    1x1 detect conv weights
    b2_ref:      (OUT, 1)     1x1 detect conv bias
    sigmask_ref: (OUT, 1)     1.0 on box/objectness channels (sigmoid applied)
    o_ref:       (OUT, L)     output (lane-dense store)
    """
    xv = x_ref[...]                                   # (C, L)
    masks = tapmask_ref[...]                          # (9, L)

    # In-kernel im2col: 9 lane-rolled + masked copies stacked along the
    # contraction axis -> one MXU matmul with K = 9*C.
    rows = []
    for k in range(9):
        dy, dx = k // 3 - 1, k % 3 - 1
        d = dy * S + dx
        if d == 0:
            rows.append(xv)                           # centre tap: no shift/mask
        else:
            shifted = pltpu.roll(xv, shift=(-d) % L, axis=1)   # XLU rotate
            rows.append(shifted * masks[k:k + 1, :])
    slab = jnp.concatenate(rows, axis=0)              # (9*C, L)

    # conv1 (3x3, BN scale already folded into w1) + BN shift + LeakyReLU(0.1)
    h = jnp.dot(w1_ref[...], slab, preferred_element_type=jnp.float32)  # (C2, L)
    h = h + shift_ref[...]
    h = jnp.where(h > 0, h, 0.1 * h)

    # 1x1 detect conv.
    p = jnp.dot(w2_ref[...], h, preferred_element_type=jnp.float32) + b2_ref[...]

    # Sigmoid on box coords + objectness (precomputed channel mask; the
    # "wasted" sigmoid on class rows rides the otherwise-idle EUP slot).
    p = jnp.where(sigmask_ref[...] > 0, jax.nn.sigmoid(p), p)

    o_ref[...] = p


def _pick_batch_block(B, max_bt=8):
    bt = min(B, max_bt)
    while B % bt:
        bt -= 1
    return bt


def detect_forward(x_nchw, params, *, num_anchors, num_classes,
                   max_batch_block=8):
    """Pallas implementation of Detect.forward.

    x_nchw: (B, C, S, S) float32
    returns: (B, S, S, num_anchors, 5 + num_classes) float32
    """
    B, C, S, _ = x_nchw.shape
    C2 = 2 * C
    NBOX = 5 + num_classes
    OUT = num_anchors * NBOX
    Bt = _pick_batch_block(B, max_batch_block)
    L = Bt * S * S

    # --- glue: layout + one-time parameter prep (plain JAX) ----------------
    # Spatial (and the batch block) go on the lane axis: (C, B*S*S).
    x_flat = jnp.transpose(x_nchw, (1, 0, 2, 3)).reshape(C, B * S * S)
    x_flat = x_flat.astype(jnp.float32)

    eps = 1e-5
    scale = params["bn_gamma"] / jnp.sqrt(params["bn_var"] + eps)       # (C2,)
    shift = (params["bn_beta"] - params["bn_mean"] * scale)
    shift = shift.reshape(C2, 1).astype(jnp.float32)

    # conv1 weight: torch (C2, C, 3, 3), BN scale folded ->
    # (C2, (ky*3+kx)*C + c) matching the in-kernel slab row order.
    w1 = params["w1"] * scale.reshape(C2, 1, 1, 1)
    w1 = jnp.transpose(w1, (0, 2, 3, 1)).reshape(C2, 9 * C).astype(jnp.float32)

    # detect conv: torch (OUT, C2, 1, 1) -> (OUT, C2); bias -> (OUT, 1)
    w2 = params["w2"].reshape(OUT, C2).astype(jnp.float32)
    b2 = params["b2"].reshape(OUT, 1).astype(jnp.float32)

    # Per-tap validity masks (replace the conv zero padding), tiled over the
    # Bt images that share the lane axis.
    pos = jnp.arange(S * S)
    ii, jj = pos // S, pos % S
    taps = []
    for dy in (-1, 0, 1):
        for dx in (-1, 0, 1):
            valid = (ii + dy >= 0) & (ii + dy < S) & (jj + dx >= 0) & (jj + dx < S)
            taps.append(valid)
    tap_mask = jnp.stack(taps, axis=0).astype(jnp.float32)     # (9, S*S)
    tap_mask = jnp.tile(tap_mask, (1, Bt))                     # (9, L)

    # Sigmoid channel mask: first 5 slots (x,y,w,h,obj) of each anchor group.
    sig_mask = ((jnp.arange(OUT) % NBOX) < 5).astype(jnp.float32).reshape(OUT, 1)

    kernel = functools.partial(_detect_kernel, S=S, L=L)

    out = pl.pallas_call(
        kernel,
        out_shape=jax.ShapeDtypeStruct((OUT, B * S * S), jnp.float32),
        grid_spec=pltpu.PrefetchScalarGridSpec(
            num_scalar_prefetch=0,
            grid=(B // Bt,),
            in_specs=[
                pl.BlockSpec((C, L), lambda g: (0, g)),          # x (lane block)
                pl.BlockSpec((9, L), lambda g: (0, 0)),          # tap masks
                pl.BlockSpec((C2, 9 * C), lambda g: (0, 0)),     # w1 (fused BN)
                pl.BlockSpec((C2, 1), lambda g: (0, 0)),         # BN shift
                pl.BlockSpec((OUT, C2), lambda g: (0, 0)),       # w2
                pl.BlockSpec((OUT, 1), lambda g: (0, 0)),        # b2
                pl.BlockSpec((OUT, 1), lambda g: (0, 0)),        # sigmoid mask
            ],
            out_specs=pl.BlockSpec((OUT, L), lambda g: (0, g)),
        ),
        compiler_params=pltpu.CompilerParams(
            dimension_semantics=("parallel",)),
    )(x_flat, tap_mask, w1, shift, w2, b2, sig_mask)

    # (OUT, B*S*S) -> (B, S, S, A, 5+num_classes)  — pure layout glue, matches
    # the PyTorch permute(0,2,3,1).view(...).
    out = out.reshape(num_anchors, NBOX, B, S, S)
    out = jnp.transpose(out, (2, 3, 4, 0, 1))
    return out


def detect_reference(x, params, *, num_anchors, num_classes):
    """Pure-JAX reference (eval-mode BN), for correctness checking."""
    B, C, S, _ = x.shape
    NBOX = 5 + num_classes
    y = lax.conv_general_dilated(
        x, params["w1"], window_strides=(1, 1), padding=((1, 1), (1, 1)),
        dimension_numbers=("NCHW", "OIHW", "NCHW"),
        precision=lax.Precision.HIGHEST)
    eps = 1e-5
    scale = params["bn_gamma"] / jnp.sqrt(params["bn_var"] + eps)
    shift = params["bn_beta"] - params["bn_mean"] * scale
    y = y * scale[None, :, None, None] + shift[None, :, None, None]
    y = jnp.where(y > 0, y, 0.1 * y)
    p = lax.conv_general_dilated(
        y, params["w2"], window_strides=(1, 1), padding=((0, 0), (0, 0)),
        dimension_numbers=("NCHW", "OIHW", "NCHW"),
        precision=lax.Precision.HIGHEST)
    p = p + params["b2"][None, :, None, None]
    p = jnp.transpose(p, (0, 2, 3, 1)).reshape(B, S, S, num_anchors, NBOX)
    box = jax.nn.sigmoid(p[..., :5])
    return jnp.concatenate([box, p[..., 5:]], axis=-1)


def init_params(key, in_channels, num_anchors, num_classes):
    C, C2 = in_channels, 2 * in_channels
    OUT = num_anchors * (5 + num_classes)
    k1, k2, k3 = jax.random.split(key, 3)
    params = {
        # Conv2d(C, 2C, 3, pad=1, bias=False)
        "w1": 0.1 * jax.random.normal(k1, (C2, C, 3, 3), jnp.float32),
        # BatchNorm2d(2C) — deterministic, non-trivial running stats
        "bn_gamma": 1.0 + 0.05 * jnp.arange(C2, dtype=jnp.float32),
        "bn_beta": 0.01 * jnp.arange(C2, dtype=jnp.float32),
        "bn_mean": 0.02 * jnp.arange(C2, dtype=jnp.float32),
        "bn_var": 1.0 + 0.03 * jnp.arange(C2, dtype=jnp.float32),
        # Conv2d(2C, OUT, 1, bias=True)
        "w2": 0.1 * jax.random.normal(k2, (OUT, C2, 1, 1), jnp.float32),
        "b2": 0.05 * jax.random.normal(k3, (OUT,), jnp.float32),
    }
    return params


if __name__ == "__main__":
    B, C, S = 2, 4, 16
    num_anchors, num_classes = 3, 3

    key = jax.random.PRNGKey(0)
    kx, kp = jax.random.split(key)
    x = jax.random.normal(kx, (B, C, S, S), jnp.float32)      # NCHW like torch
    params = init_params(kp, C, num_anchors, num_classes)

    out = detect_forward(x, params,
                         num_anchors=num_anchors, num_classes=num_classes)
    out = jax.block_until_ready(out)
    assert out.shape == (B, S, S, num_anchors, 5 + num_classes)
    assert out.dtype == jnp.float32

    ref = jax.block_until_ready(
        detect_reference(x, params,
                         num_anchors=num_anchors, num_classes=num_classes))
    max_err = float(jnp.max(jnp.abs(out - ref)))
    assert jnp.allclose(out, ref, atol=1e-4, rtol=1e-4), max_err

    print("KERNEL_OK")
</pallas_src>

<mosaic_0001>
module attributes {stable_mosaic.version = 11 : i64} {
  func.func @_detect_kernel(%arg0: i32, %arg1: memref<4x512xf32, #tpu.memory_space<vmem>>, %arg2: memref<9x512xf32, #tpu.memory_space<vmem>>, %arg3: memref<8x36xf32, #tpu.memory_space<vmem>>, %arg4: memref<8x1xf32, #tpu.memory_space<vmem>>, %arg5: memref<24x8xf32, #tpu.memory_space<vmem>>, %arg6: memref<24x1xf32, #tpu.memory_space<vmem>>, %arg7: memref<24x1xf32, #tpu.memory_space<vmem>>, %arg8: memref<24x512xf32, #tpu.memory_space<vmem>>) attributes {dimension_semantics = [#tpu.dimension_semantics<parallel>], iteration_bounds = array<i64: 1>, scalar_prefetch = 0 : i64, scratch_operands = 0 : i64, tpu.core_type = #tpu.core_type<tc>, window_params = [{transform_indices = @transform_0, window_bounds = array<i64: 4, 512>}, {pipeline_mode = #tpu.pipeline_mode<synchronous>, transform_indices = @transform_1, window_bounds = array<i64: 9, 512>}, {pipeline_mode = #tpu.pipeline_mode<synchronous>, transform_indices = @transform_2, window_bounds = array<i64: 8, 36>}, {pipeline_mode = #tpu.pipeline_mode<synchronous>, transform_indices = @transform_3, window_bounds = array<i64: 8, 1>}, {pipeline_mode = #tpu.pipeline_mode<synchronous>, transform_indices = @transform_4, window_bounds = array<i64: 24, 8>}, {pipeline_mode = #tpu.pipeline_mode<synchronous>, transform_indices = @transform_5, window_bounds = array<i64: 24, 1>}, {pipeline_mode = #tpu.pipeline_mode<synchronous>, transform_indices = @transform_6, window_bounds = array<i64: 24, 1>}, {transform_indices = @transform_7, window_bounds = array<i64: 24, 512>}]} {
    %c0 = arith.constant 0 : index
    %c0_0 = arith.constant 0 : index
    %0 = vector.load %arg1[%c0, %c0_0] : memref<4x512xf32, #tpu.memory_space<vmem>>, vector<4x512xf32>
    %c0_1 = arith.constant 0 : index
    %c0_2 = arith.constant 0 : index
    %1 = vector.load %arg2[%c0_1, %c0_2] : memref<9x512xf32, #tpu.memory_space<vmem>>, vector<9x512xf32>
    %c17_i32 = arith.constant 17 : i32
    %2 = tpu.dynamic_rotate %0 by %c17_i32 dim 1 : vector<4x512xf32>, i32 -> vector<4x512xf32>
    %3 = vector.extract_strided_slice %1 {offsets = [0, 0], sizes = [1, 512], strides = [1, 1]} : vector<9x512xf32> to vector<1x512xf32>
    %4 = vector.broadcast %3 : vector<1x512xf32> to vector<4x512xf32>
    %5 = arith.mulf %2, %4 : vector<4x512xf32>
    %c16_i32 = arith.constant 16 : i32
    %6 = tpu.dynamic_rotate %0 by %c16_i32 dim 1 : vector<4x512xf32>, i32 -> vector<4x512xf32>
    %7 = vector.extract_strided_slice %1 {offsets = [1, 0], sizes = [1, 512], strides = [1, 1]} : vector<9x512xf32> to vector<1x512xf32>
    %8 = vector.broadcast %7 : vector<1x512xf32> to vector<4x512xf32>
    %9 = arith.mulf %6, %8 : vector<4x512xf32>
    %c15_i32 = arith.constant 15 : i32
    %10 = tpu.dynamic_rotate %0 by %c15_i32 dim 1 : vector<4x512xf32>, i32 -> vector<4x512xf32>
    %11 = vector.extract_strided_slice %1 {offsets = [2, 0], sizes = [1, 512], strides = [1, 1]} : vector<9x512xf32> to vector<1x512xf32>
    %12 = vector.broadcast %11 : vector<1x512xf32> to vector<4x512xf32>
    %13 = arith.mulf %10, %12 : vector<4x512xf32>
    %c1_i32 = arith.constant 1 : i32
    %14 = tpu.dynamic_rotate %0 by %c1_i32 dim 1 : vector<4x512xf32>, i32 -> vector<4x512xf32>
    %15 = vector.extract_strided_slice %1 {offsets = [3, 0], sizes = [1, 512], strides = [1, 1]} : vector<9x512xf32> to vector<1x512xf32>
    %16 = vector.broadcast %15 : vector<1x512xf32> to vector<4x512xf32>
    %17 = arith.mulf %14, %16 : vector<4x512xf32>
    %c511_i32 = arith.constant 511 : i32
    %18 = tpu.dynamic_rotate %0 by %c511_i32 dim 1 : vector<4x512xf32>, i32 -> vector<4x512xf32>
    %19 = vector.extract_strided_slice %1 {offsets = [5, 0], sizes = [1, 512], strides = [1, 1]} : vector<9x512xf32> to vector<1x512xf32>
    %20 = vector.broadcast %19 : vector<1x512xf32> to vector<4x512xf32>
    %21 = arith.mulf %18, %20 : vector<4x512xf32>
    %c497_i32 = arith.constant 497 : i32
    %22 = tpu.dynamic_rotate %0 by %c497_i32 dim 1 : vector<4x512xf32>, i32 -> vector<4x512xf32>
    %23 = vector.extract_strided_slice %1 {offsets = [6, 0], sizes = [1, 512], strides = [1, 1]} : vector<9x512xf32> to vector<1x512xf32>
    %24 = vector.broadcast %23 : vector<1x512xf32> to vector<4x512xf32>
    %25 = arith.mulf %22, %24 : vector<4x512xf32>
    %c496_i32 = arith.constant 496 : i32
    %26 = tpu.dynamic_rotate %0 by %c496_i32 dim 1 : vector<4x512xf32>, i32 -> vector<4x512xf32>
    %27 = vector.extract_strided_slice %1 {offsets = [7, 0], sizes = [1, 512], strides = [1, 1]} : vector<9x512xf32> to vector<1x512xf32>
    %28 = vector.broadcast %27 : vector<1x512xf32> to vector<4x512xf32>
    %29 = arith.mulf %26, %28 : vector<4x512xf32>
    %c495_i32 = arith.constant 495 : i32
    %30 = tpu.dynamic_rotate %0 by %c495_i32 dim 1 : vector<4x512xf32>, i32 -> vector<4x512xf32>
    %31 = vector.extract_strided_slice %1 {offsets = [8, 0], sizes = [1, 512], strides = [1, 1]} : vector<9x512xf32> to vector<1x512xf32>
    %32 = vector.broadcast %31 : vector<1x512xf32> to vector<4x512xf32>
    %33 = arith.mulf %30, %32 : vector<4x512xf32>
    %34 = tpu.concatenate %5, %9, %13, %17, %0, %21, %25, %29, %33 in 0 : vector<4x512xf32>, vector<4x512xf32>, vector<4x512xf32>, vector<4x512xf32>, vector<4x512xf32>, vector<4x512xf32>, vector<4x512xf32>, vector<4x512xf32>, vector<4x512xf32> -> vector<36x512xf32>
    %c0_3 = arith.constant 0 : index
    %c0_4 = arith.constant 0 : index
    %35 = vector.load %arg3[%c0_3, %c0_4] : memref<8x36xf32, #tpu.memory_space<vmem>>, vector<8x36xf32>
    %cst = arith.constant dense<0.000000e+00> : vector<8x512xf32>
    %36 = tpu.matmul %35, %34, %cst {dimension_numbers = #tpu.dot_dimension_numbers<[1], [0], [0], [1], [0, 0, 1, 1], [], []>} : vector<8x36xf32>, vector<36x512xf32>, vector<8x512xf32> -> vector<8x512xf32>
    %c0_5 = arith.constant 0 : index
    %c0_6 = arith.constant 0 : index
    %37 = vector.load %arg4[%c0_5, %c0_6] : memref<8x1xf32, #tpu.memory_space<vmem>>, vector<8x1xf32>
    %38 = vector.broadcast %37 : vector<8x1xf32> to vector<8x512xf32>
    %39 = arith.addf %36, %38 : vector<8x512xf32>
    %cst_7 = arith.constant 0.000000e+00 : f32
    %40 = vector.broadcast %cst_7 : f32 to vector<8x512xf32>
    %41 = arith.cmpf ogt, %39, %40 : vector<8x512xf32>
    %cst_8 = arith.constant 1.000000e-01 : f32
    %42 = vector.broadcast %cst_8 : f32 to vector<8x512xf32>
    %43 = arith.mulf %42, %39 : vector<8x512xf32>
    %44 = arith.select %41, %39, %43 : vector<8x512xi1>, vector<8x512xf32>
    %c0_9 = arith.constant 0 : index
    %c0_10 = arith.constant 0 : index
    %45 = vector.load %arg5[%c0_9, %c0_10] : memref<24x8xf32, #tpu.memory_space<vmem>>, vector<24x8xf32>
    %cst_11 = arith.constant dense<0.000000e+00> : vector<24x512xf32>
    %46 = tpu.matmul %45, %44, %cst_11 {dimension_numbers = #tpu.dot_dimension_numbers<[1], [0], [0], [1], [0, 0, 1, 1], [], []>} : vector<24x8xf32>, vector<8x512xf32>, vector<24x512xf32> -> vector<24x512xf32>
    %c0_12 = arith.constant 0 : index
    %c0_13 = arith.constant 0 : index
    %47 = vector.load %arg6[%c0_12, %c0_13] : memref<24x1xf32, #tpu.memory_space<vmem>>, vector<24x1xf32>
    %48 = vector.broadcast %47 : vector<24x1xf32> to vector<24x512xf32>
    %49 = arith.addf %46, %48 : vector<24x512xf32>
    %c0_14 = arith.constant 0 : index
    %c0_15 = arith.constant 0 : index
    %50 = vector.load %arg7[%c0_14, %c0_15] : memref<24x1xf32, #tpu.memory_space<vmem>>, vector<24x1xf32>
    %cst_16 = arith.constant 0.000000e+00 : f32
    %51 = vector.broadcast %cst_16 : f32 to vector<24x1xf32>
    %52 = arith.cmpf ogt, %50, %51 : vector<24x1xf32>
    %53 = arith.negf %49 : vector<24x512xf32>
    %54 = math.exp %53 : vector<24x512xf32>
    %cst_17 = arith.constant 1.000000e+00 : f32
    %55 = vector.broadcast %cst_17 : f32 to vector<24x512xf32>
    %56 = arith.addf %55, %54 : vector<24x512xf32>
    %57 = arith.divf %55, %56 : vector<24x512xf32>
    %58 = vector.shape_cast %52 : vector<24x1xi1> to vector<24x1xi1>
    %59 = vector.broadcast %58 : vector<24x1xi1> to vector<24x512xi1>
    %60 = arith.select %59, %57, %49 : vector<24x512xi1>, vector<24x512xf32>
    %c0_18 = arith.constant 0 : index
    %c0_19 = arith.constant 0 : index
    %61 = vector.load %arg8[%c0_18, %c0_19] : memref<24x512xf32, #tpu.memory_space<vmem>>, vector<24x512xf32>
    tpu.vector_store %arg8[%c0_18, %c0_19], %60 {strides = array<i32>} : memref<24x512xf32, #tpu.memory_space<vmem>>, vector<24x512xf32>,
    return
  }
  func.func @transform_0(%arg0: i32) -> (i32, i32) {
    %c0_i32 = arith.constant 0 : i32
    %c0_i32_0 = arith.constant 0 : i32
    return %c0_i32, %arg0 : i32, i32
  }
  func.func @transform_1(%arg0: i32) -> (i32, i32) {
    %c0_i32 = arith.constant 0 : i32
    %c0_i32_0 = arith.constant 0 : i32
    %c0_i32_1 = arith.constant 0 : i32
    return %c0_i32, %c0_i32_0 : i32, i32
  }
  func.func @transform_2(%arg0: i32) -> (i32, i32) {
    %c0_i32 = arith.constant 0 : i32
    %c0_i32_0 = arith.constant 0 : i32
    %c0_i32_1 = arith.constant 0 : i32
    return %c0_i32, %c0_i32_0 : i32, i32
  }
  func.func @transform_3(%arg0: i32) -> (i32, i32) {
    %c0_i32 = arith.constant 0 : i32
    %c0_i32_0 = arith.constant 0 : i32
    %c0_i32_1 = arith.constant 0 : i32
    return %c0_i32, %c0_i32_0 : i32, i32
  }
  func.func @transform_4(%arg0: i32) -> (i32, i32) {
    %c0_i32 = arith.constant 0 : i32
    %c0_i32_0 = arith.constant 0 : i32
    %c0_i32_1 = arith.constant 0 : i32
    return %c0_i32, %c0_i32_0 : i32, i32
  }
  func.func @transform_5(%arg0: i32) -> (i32, i32) {
    %c0_i32 = arith.constant 0 : i32
    %c0_i32_0 = arith.constant 0 : i32
    %c0_i32_1 = arith.constant 0 : i32
    return %c0_i32, %c0_i32_0 : i32, i32
  }
  func.func @transform_6(%arg0: i32) -> (i32, i32) {
    %c0_i32 = arith.constant 0 : i32
    %c0_i32_0 = arith.constant 0 : i32
    %c0_i32_1 = arith.constant 0 : i32
    return %c0_i32, %c0_i32_0 : i32, i32
  }
  func.func @transform_7(%arg0: i32) -> (i32, i32) {
    %c0_i32 = arith.constant 0 : i32
    %c0_i32_0 = arith.constant 0 : i32
    return %c0_i32, %arg0 : i32, i32
  }
}

</mosaic_0001>

<llo_original>
// kernel: tpu_custom_call.1
$region0: #{tpu_custom_call.1}
  #allocation0 [shape = 'u32[]', space=smem, size = 0x4, offset = 0x4, fixed_abs, tag = 'smem constant byte address 0x4 - core index']
  #allocation1 [shape = 'u32[144,128]{1,0:T(1,128)}', space=vmem, size = 0x12000, scoped, tag = 'internal scratch']
  %s0 = inlined_call_operand.vmem [shape: f32[4,512], index: 0, kind: input, shape index: {}]
  %s1 = inlined_call_operand.vmem [shape: f32[9,512], index: 1, kind: input, shape index: {}]
  %s2 = inlined_call_operand.vmem [shape: f32[8,36], index: 2, kind: input, shape index: {}]
  %s3 = inlined_call_operand.vmem [shape: f32[8,1], index: 3, kind: input, shape index: {}]
  %s4 = inlined_call_operand.vmem [shape: f32[24,8], index: 4, kind: input, shape index: {}]
  %s5 = inlined_call_operand.vmem [shape: f32[24,1], index: 5, kind: input, shape index: {}]
  %s6 = inlined_call_operand.vmem [shape: f32[24,1], index: 6, kind: input, shape index: {}]
  %s7 = inlined_call_operand.hbm [shape: f32[24,512], index: 7, kind: output, shape index: {}]
  %s8 = sld [smem:[#allocation0]]
  $region38: #{tpu_custom_call.1} parent=0
    _
  %s10 = ssub.s32 1, %s8
  %s11 = scalar_select 0, %s10, %s8
  $region1: #{tpu_custom_call.1} parent=0
    #allocation2 [shape = 'u8[49152]{0}', space=vmem, size = 0xc000, scoped, tag = 'output window, operand 0, single buffered']
    #allocation3 [shape = 's32[1]{0}', space=sflag, size = 0x4, scoped, tag = 'scoped memory for tpu_custom_call.1']
    %12 = vsyncpa [#allocation3], 0
    // Predicated region
    $region2: #{tpu_custom_call.1} parent=1 // pred_check
      _
    $region3: #{tpu_custom_call.1} parent=1 // pred_check_branch
      %14 = sbr.rel (0) target = $region5
    $region4: #{tpu_custom_call.1} parent=1 // pred_region
      _
    $region5: #{tpu_custom_call.1} parent=1 // pred_fallthru
      _
    // Predicated region
    $region6: #{tpu_custom_call.1} parent=1 // pred_check
      _
    $region7: #{tpu_custom_call.1} parent=1 // pred_check_branch
      %16 = sbr.rel (0) target = $region9
    $region8: #{tpu_custom_call.1} parent=1 // pred_region
      _
    $region9: #{tpu_custom_call.1} parent=1 // pred_fallthru
      _
    // Predicated region
    $region10: #{tpu_custom_call.1} parent=1 // pred_check
      _
    $region11: #{tpu_custom_call.1} parent=1 // pred_check_branch
      %18 = sbr.rel (0) target = $region13
    $region12: #{tpu_custom_call.1} parent=1 // pred_region
      _
    $region13: #{tpu_custom_call.1} parent=1 // pred_fallthru
      _
    // Predicated region
    $region14: #{tpu_custom_call.1} parent=1 // pred_check
      _
    $region15: #{tpu_custom_call.1} parent=1 // pred_check_branch
      %20 = sbr.rel (0) target = $region17
    $region16: #{tpu_custom_call.1} parent=1 // pred_region
      _
    $region17: #{tpu_custom_call.1} parent=1 // pred_fallthru
      _
    // Predicated region
    $region18: #{tpu_custom_call.1} parent=1 // pred_check
      _
    $region19: #{tpu_custom_call.1} parent=1 // pred_check_branch
      %22 = sbr.rel (0) target = $region21
    $region20: #{tpu_custom_call.1} parent=1 // pred_region
      _
    $region21: #{tpu_custom_call.1} parent=1 // pred_fallthru
      _
    // Predicated region
    $region22: #{tpu_custom_call.1} parent=1 // pred_check
      _
    $region23: #{tpu_custom_call.1} parent=1 // pred_check_branch
      %24 = sbr.rel (0) target = $region25
    $region24: #{tpu_custom_call.1} parent=1 // pred_region
      _
    $region25: #{tpu_custom_call.1} parent=1 // pred_fallthru
      _
    // Predicated region
    $region26: #{tpu_custom_call.1} parent=1 // pred_check
      _
    $region27: #{tpu_custom_call.1} parent=1 // pred_check_branch
      %26 = sbr.rel (0) target = $region29
    $region28: #{tpu_custom_call.1} parent=1 // pred_region
      _
    $region29: #{tpu_custom_call.1} parent=1 // pred_fallthru
      _
    %v27 = vld [vmem:[%s0] sm:$0xff]
    %v28 = vld [vmem:[%s0 + $0x8] sm:$0xff]
    %v29 = vld [vmem:[%s1] sm:$0xff]
    %v30 = vld [vmem:[%s1 + $0x8] sm:$0xff]
    %v31 = vld [vmem:[%s1 + $0x10] sm:$0xff]
    %v32 = vld [vmem:[%s1 + $0x18] sm:$0xff]
    %v33 = vld [vmem:[%s1 + $0x20] sm:$0x1]
    %v34 = vld [vmem:[%s1 + $0x28] sm:$0x1]
    %v35 = vld [vmem:[%s1 + $0x30] sm:$0x1]
    %v36 = vld [vmem:[%s1 + $0x38] sm:$0x1]
    %v39 = vcombine.high %v27, %v27
    %v40 = vcombine.high %v28, %v28
    %43 = vrot.lane.b32.xlu0 %v27, 17
    %v44 = vpop.permute.xlu0 %43
    %45 = vrot.lane.b32.xlu0 %v39, 17
    %v46 = vpop.permute.xlu0 %45
    %47 = vrot.lane.b32.xlu0 %v28, 17
    %v48 = vpop.permute.xlu0 %47
    %49 = vrot.lane.b32.xlu0 %v40, 17
    %v50 = vpop.permute.xlu0 %49
    %v51 = vlaneseq
    %v52 = vand.u32 %v51, 127
    %vm53 = vcmp.lt.s32.totalorder %v52, 17
    %v54 = vsel %vm53, %v48, %v50
    %v55 = vsel %vm53, %v46, %v48
    %v56 = vsel %vm53, %v44, %v46
    %v57 = vsel %vm53, %v50, %v44
    %v58 = vlaneseq
    %v59 = vshrl.u32 %v58, 7
    %v60 = vsub.s32 0, %v59
    %v61 = vrot.slane %v29, %v60
    %v62 = vlaneseq
    %v63 = vshrl.u32 %v62, 7
    %v64 = vsub.s32 0, %v63
    %v65 = vrot.slane %v30, %v64
    %v66 = vlaneseq
    %v67 = vshrl.u32 %v66, 7
    %v68 = vsub.s32 0, %v67
    %v69 = vrot.slane %v31, %v68
    %v70 = vlaneseq
    %v71 = vshrl.u32 %v70, 7
    %v72 = vsub.s32 0, %v71
    %v73 = vrot.slane %v32, %v72
    %v74 = vmul.f32 %v57, %v61
    %v75 = vmul.f32 %v56, %v65
    %v76 = vmul.f32 %v55, %v69
    %v77 = vmul.f32 %v54, %v73
    %78 = vrot.lane.b32.xlu0 %v27, 16
    %v79 = vpop.permute.xlu0 %78
    %80 = vrot.lane.b32.xlu0 %v39, 16
    %v81 = vpop.permute.xlu0 %80
    %82 = vrot.lane.b32.xlu0 %v28, 16
    %v83 = vpop.permute.xlu0 %82
    %84 = vrot.lane.b32.xlu0 %v40, 16
    %v85 = vpop.permute.xlu0 %84
    %vm86 = vcmp.lt.s32.totalorder %v52, 16
    %v87 = vsel %vm86, %v83, %v85
    %v88 = vsel %vm86, %v81, %v83
    %v89 = vsel %vm86, %v79, %v81
    %v90 = vsel %vm86, %v85, %v79
    %v91 = vlaneseq
    %v92 = vshrl.u32 %v91, 7
    %v93 = vsub.s32 1, %v92
    %v94 = vrot.slane %v29, %v93
    %v95 = vlaneseq
    %v96 = vshrl.u32 %v95, 7
    %v97 = vsub.s32 1, %v96
    %v98 = vrot.slane %v30, %v97
    %v99 = vlaneseq
    %v100 = vshrl.u32 %v99, 7
    %v101 = vsub.s32 1, %v100
    %v102 = vrot.slane %v31, %v101
    %v103 = vlaneseq
    %v104 = vshrl.u32 %v103, 7
    %v105 = vsub.s32 1, %v104
    %v106 = vrot.slane %v32, %v105
    %v107 = vmul.f32 %v90, %v94
    %v108 = vmul.f32 %v89, %v98
    %v109 = vmul.f32 %v88, %v102
    %v110 = vmul.f32 %v87, %v106
    %111 = vrot.lane.b32.xlu0 %v27, 15
    %v112 = vpop.permute.xlu0 %111
    %113 = vrot.lane.b32.xlu0 %v39, 15
    %v114 = vpop.permute.xlu0 %113
    %115 = vrot.lane.b32.xlu0 %v28, 15
    %v116 = vpop.permute.xlu0 %115
    %117 = vrot.lane.b32.xlu0 %v40, 15
    %v118 = vpop.permute.xlu0 %117
    %vm119 = vcmp.lt.s32.totalorder %v52, 15
    %v120 = vsel %vm119, %v116, %v118
    %v121 = vsel %vm119, %v114, %v116
    %v122 = vsel %vm119, %v112, %v114
    %v123 = vsel %vm119, %v118, %v112
    %v124 = vlaneseq
    %v125 = vshrl.u32 %v124, 7
    %v126 = vsub.s32 2, %v125
    %v127 = vrot.slane %v29, %v126
    %v128 = vlaneseq
    %v129 = vshrl.u32 %v128, 7
    %v130 = vsub.s32 2, %v129
    %v131 = vrot.slane %v30, %v130
    %v132 = vlaneseq
    %v133 = vshrl.u32 %v132, 7
    %v134 = vsub.s32 2, %v133
    %v135 = vrot.slane %v31, %v134
    %v136 = vlaneseq
    %v137 = vshrl.u32 %v136, 7
    %v138 = vsub.s32 2, %v137
    %v139 = vrot.slane %v32, %v138
    %v140 = vmul.f32 %v123, %v127
    %v141 = vmul.f32 %v122, %v131
    %v142 = vmul.f32 %v121, %v135
    %v143 = vmul.f32 %v120, %v139
    %144 = vrot.lane.b32.xlu0 %v27, 1
    %v145 = vpop.permute.xlu0 %144
    %146 = vrot.lane.b32.xlu0 %v39, 1
    %v147 = vpop.permute.xlu0 %146
    %148 = vrot.lane.b32.xlu0 %v28, 1
    %v149 = vpop.permute.xlu0 %148
    %150 = vrot.lane.b32.xlu0 %v40, 1
    %v151 = vpop.permute.xlu0 %150
    %vm152 = vcmp.lt.s32.totalorder %v52, 1
    %v153 = vsel %vm152, %v149, %v151
    %v154 = vsel %vm152, %v147, %v149
    %v155 = vsel %vm152, %v145, %v147
    %v156 = vsel %vm152, %v151, %v145
    %v157 = vlaneseq
    %v158 = vshrl.u32 %v157, 7
    %v159 = vsub.s32 3, %v158
    %v160 = vrot.slane %v29, %v159
    %v161 = vlaneseq
    %v162 = vshrl.u32 %v161, 7
    %v163 = vsub.s32 3, %v162
    %v164 = vrot.slane %v30, %v163
    %v165 = vlaneseq
    %v166 = vshrl.u32 %v165, 7
    %v167 = vsub.s32 3, %v166
    %v168 = vrot.slane %v31, %v167
    %v169 = vlaneseq
    %v170 = vshrl.u32 %v169, 7
    %v171 = vsub.s32 3, %v170
    %v172 = vrot.slane %v32, %v171
    %v173 = vmul.f32 %v156, %v160
    %v174 = vmul.f32 %v155, %v164
    %v175 = vmul.f32 %v154, %v168
    %v176 = vmul.f32 %v153, %v172
    %177 = vrot.lane.b32.xlu0 %v27, 127
    %v178 = vpop.permute.xlu0 %177
    %179 = vrot.lane.b32.xlu0 %v39, 127
    %v180 = vpop.permute.xlu0 %179
    %181 = vrot.lane.b32.xlu0 %v28, 127
    %v182 = vpop.permute.xlu0 %181
    %183 = vrot.lane.b32.xlu0 %v40, 127
    %v184 = vpop.permute.xlu0 %183
    %vm185 = vcmp.lt.s32.totalorder %v52, 127
    %v186 = vsel %vm185, %v182, %v184
    %v187 = vsel %vm185, %v180, %v182
    %v188 = vsel %vm185, %v178, %v180
    %v189 = vsel %vm185, %v184, %v178
    %v190 = vlaneseq
    %v191 = vshrl.u32 %v190, 7
    %v192 = vsub.s32 5, %v191
    %v193 = vrot.slane %v29, %v192
    %v194 = vlaneseq
    %v195 = vshrl.u32 %v194, 7
    %v196 = vsub.s32 5, %v195
    %v197 = vrot.slane %v30, %v196
    %v198 = vlaneseq
    %v199 = vshrl.u32 %v198, 7
    %v200 = vsub.s32 5, %v199
    %v201 = vrot.slane %v31, %v200
    %v202 = vlaneseq
    %v203 = vshrl.u32 %v202, 7
    %v204 = vsub.s32 5, %v203
    %v205 = vrot.slane %v32, %v204
    %v206 = vmul.f32 %v188, %v193
    %v207 = vmul.f32 %v187, %v197
    %v208 = vmul.f32 %v186, %v201
    %v209 = vmul.f32 %v189, %v205
    %210 = vrot.lane.b32.xlu0 %v27, 113
    %v211 = vpop.permute.xlu0 %210
    %212 = vrot.lane.b32.xlu0 %v39, 113
    %v213 = vpop.permute.xlu0 %212
    %214 = vrot.lane.b32.xlu0 %v28, 113
    %v215 = vpop.permute.xlu0 %214
    %216 = vrot.lane.b32.xlu0 %v40, 113
    %v217 = vpop.permute.xlu0 %216
    %vm218 = vcmp.lt.s32.totalorder %v52, 113
    %v219 = vsel %vm218, %v215, %v217
    %v220 = vsel %vm218, %v213, %v215
    %v221 = vsel %vm218, %v211, %v213
    %v222 = vsel %vm218, %v217, %v211
    %v223 = vlaneseq
    %v224 = vshrl.u32 %v223, 7
    %v225 = vsub.s32 6, %v224
    %v226 = vrot.slane %v29, %v225
    %v227 = vlaneseq
    %v228 = vshrl.u32 %v227, 7
    %v229 = vsub.s32 6, %v228
    %v230 = vrot.slane %v30, %v229
    %v231 = vlaneseq
    %v232 = vshrl.u32 %v231, 7
    %v233 = vsub.s32 6, %v232
    %v234 = vrot.slane %v31, %v233
    %v235 = vlaneseq
    %v236 = vshrl.u32 %v235, 7
    %v237 = vsub.s32 6, %v236
    %v238 = vrot.slane %v32, %v237
    %v239 = vmul.f32 %v221, %v226
    %v240 = vmul.f32 %v220, %v230
    %v241 = vmul.f32 %v219, %v234
    %v242 = vmul.f32 %v222, %v238
    %243 = vrot.lane.b32.xlu0 %v27, 112
    %v244 = vpop.permute.xlu0 %243
    %245 = vrot.lane.b32.xlu0 %v39, 112
    %v246 = vpop.permute.xlu0 %245
    %247 = vrot.lane.b32.xlu0 %v28, 112
    %v248 = vpop.permute.xlu0 %247
    %249 = vrot.lane.b32.xlu0 %v40, 112
    %v250 = vpop.permute.xlu0 %249
    %vm251 = vcmp.lt.s32.totalorder %v52, 112
    %v252 = vsel %vm251, %v248, %v250
    %v253 = vsel %vm251, %v246, %v248
    %v254 = vsel %vm251, %v244, %v246
    %v255 = vsel %vm251, %v250, %v244
    %v256 = vlaneseq
    %v257 = vshrl.u32 %v256, 7
    %v258 = vsub.s32 7, %v257
    %v259 = vrot.slane %v29, %v258
    %v260 = vlaneseq
    %v261 = vshrl.u32 %v260, 7
    %v262 = vsub.s32 7, %v261
    %v263 = vrot.slane %v30, %v262
    %v264 = vlaneseq
    %v265 = vshrl.u32 %v264, 7
    %v266 = vsub.s32 7, %v265
    %v267 = vrot.slane %v31, %v266
    %v268 = vlaneseq
    %v269 = vshrl.u32 %v268, 7
    %v270 = vsub.s32 7, %v269
    %v271 = vrot.slane %v32, %v270
    %v272 = vmul.f32 %v254, %v259
    %v273 = vmul.f32 %v253, %v263
    %v274 = vmul.f32 %v252, %v267
    %v275 = vmul.f32 %v255, %v271
    %276 = vrot.lane.b32.xlu0 %v27, 111
    %v277 = vpop.permute.xlu0 %276
    %278 = vrot.lane.b32.xlu0 %v39, 111
    %v279 = vpop.permute.xlu0 %278
    %280 = vrot.lane.b32.xlu0 %v28, 111
    %v281 = vpop.permute.xlu0 %280
    %282 = vrot.lane.b32.xlu0 %v40, 111
    %v283 = vpop.permute.xlu0 %282
    %vm284 = vcmp.lt.s32.totalorder %v52, 111
    %v285 = vsel %vm284, %v281, %v283
    %v286 = vsel %vm284, %v279, %v281
    %v287 = vsel %vm284, %v277, %v279
    %v288 = vsel %vm284, %v283, %v277
    %v289 = vlaneseq
    %v290 = vshrl.u32 %v289, 7
    %v291 = vsub.s32 0, %v290
    %v292 = vrot.slane %v33, %v291
    %v293 = vlaneseq
    %v294 = vshrl.u32 %v293, 7
    %v295 = vsub.s32 0, %v294
    %v296 = vrot.slane %v34, %v295
    %v297 = vlaneseq
    %v298 = vshrl.u32 %v297, 7
    %v299 = vsub.s32 0, %v298
    %v300 = vrot.slane %v35, %v299
    %v301 = vlaneseq
    %v302 = vshrl.u32 %v301, 7
    %v303 = vsub.s32 0, %v302
    %v304 = vrot.slane %v36, %v303
    %v305 = vmul.f32 %v287, %v292
    %v306 = vmul.f32 %v286, %v296
    %v307 = vmul.f32 %v285, %v300
    %v308 = vmul.f32 %v288, %v304
    %v313 = vrot.slane %v107, 4
    %v314 = vrot.slane %v108, 4
    %v315 = vrot.slane %v109, 4
    %v316 = vrot.slane %v110, 4
    %v325 = vrot.slane %v173, 4
    %v326 = vrot.slane %v174, 4
    %v327 = vrot.slane %v175, 4
    %v328 = vrot.slane %v176, 4
    %v337 = vrot.slane %v206, 4
    %v338 = vrot.slane %v207, 4
    %v339 = vrot.slane %v208, 4
    %v340 = vrot.slane %v209, 4
    %v349 = vrot.slane %v272, 4
    %v350 = vrot.slane %v273, 4
    %v351 = vrot.slane %v274, 4
    %v352 = vrot.slane %v275, 4
    %vm357 = vcmask 1043456
    %v358 = vsel %vm357, %v74, %v313
    %v359 = vsel %vm357, %v75, %v314
    %v360 = vsel %vm357, %v76, %v315
    %v361 = vsel %vm357, %v77, %v316
    %v362 = vsel %vm357, %v140, %v325
    %v363 = vsel %vm357, %v141, %v326
    %v364 = vsel %vm357, %v142, %v327
    %v365 = vsel %vm357, %v143, %v328
    %v366 = vsel %vm357, %v27, %v337
    %v367 = vsel %vm357, %v39, %v338
    %v368 = vsel %vm357, %v28, %v339
    %v369 = vsel %vm357, %v40, %v340
    %v370 = vsel %vm357, %v239, %v349
    %v371 = vsel %vm357, %v240, %v350
    %v372 = vsel %vm357, %v241, %v351
    %v373 = vsel %vm357, %v242, %v352
    %v374 = vld [vmem:[%s2] sm:$0xff]
    %v375 = vld [vmem:[%s3] sm:$0xff]
    %377 = vset.pattern.permute.xlu0 0
    %378 = vperm.xlu0 %377, %v375
    %v379 = vpop.permute.xlu0 %378
    %vm381 = vcmask 293888
    %v383 = vsel %vm381, %v374, 0
    %v386 = vsel %vm357, %v305, 0
    %v389 = vsel %vm357, %v306, 0
    %v392 = vsel %vm357, %v307, 0
    %v395 = vsel %vm357, %v308, 0
    %397 = vmatprep.subr.mxu0 %v359
    %398 = vmatpush1.msra.mxu0 %v358
    %399 = vmatprep.subr.mxu0 %v363
    %400 = vmatpush1.msra.mxu0 %v362
    %401 = vmatprep.subr.mxu0 %v367
    %402 = vmatpush1.msra.mxu0 %v366
    %403 = vmatprep.subr.mxu0 %v371
    %404 = vmatpush1.msra.mxu0 %v370
    %405 = vmatprep.subr.mxu0 %v389
    %406 = vmatpush1.msra.mxu0 %v386
    %407 = vmatprep.subr.mxu0 0.0
    %408 = vmatpush1.msra.mxu0 0.0
    %409 = vmatprep.subr.mxu0 0.0
    %410 = vmatpush1.msra.mxu0 0.0
    %411 = vmatprep.subr.mxu0 0.0
    %412 = vmatpush1.msra.mxu0 0.0
    %413 = vmatprep.subr.mxu0 0.0
    %414 = vmatpush1.msra.mxu0 0.0
    %415 = vmatprep.subr.mxu0 0.0
    %416 = vmatpush1.msra.mxu0 0.0
    %417 = vmatprep.subr.mxu0 0.0
    %418 = vmatpush1.msra.mxu0 0.0
    %419 = vmatprep.subr.mxu0 0.0
    %420 = vmatpush1.msra.mxu0 0.0
    %421 = vmatprep.subr.mxu0 0.0
    %422 = vmatpush1.msra.mxu0 0.0
    %423 = vmatprep.subr.mxu0 0.0
    %424 = vmatpush1.msra.mxu0 0.0
    %425 = vmatprep.subr.mxu0 0.0
    %426 = vmatpush1.msra.mxu0 0.0
    %427 = vmatprep.subr.mxu0 0.0
    %428 = vmatpush1.msra.mxu0 0.0
    %429 = vmatprep.subr.mxu0 0.0
    %430 = vmatpush1.msra.mxu0 0.0
    %431 = vmatprep.subr.mxu0 0.0
    %432 = vmatpush1.msra.mxu0 0.0
    %433 = vmatprep.subr.mxu0 0.0
    %434 = vmatpush1.msra.mxu0 0.0
    %435 = vmatprep.subr.mxu0 0.0
    %436 = vmatpush1.msra.mxu0 0.0
    %437 = vmatprep.subr.mxu0 0.0
    %438 = vmatpush1.msra.mxu0 0.0
    %439 = vmatprep.subr.mxu0 0.0
    %440 = vmatpush1.msra.mxu0 0.0
    %441 = vmatprep.subr.mxu0 0.0
    %442 = vmatpush1.msra.mxu0 0.0
    %443 = vmatprep.subr.mxu0 0.0
    %444 = vmatpush1.msra.mxu0 0.0
    %445 = vmatprep.subr.mxu0 0.0
    %446 = vmatpush1.msra.mxu0 0.0
    %447 = vmatprep.subr.mxu0 0.0
    %448 = vmatpush1.msra.mxu0 0.0
    %449 = vmatprep.subr.mxu0 0.0
    %450 = vmatpush1.msra.mxu0 0.0
    %451 = vmatprep.subr.mxu0 0.0
    %452 = vmatpush1.msra.mxu0 0.0
    %453 = vmatprep.subr.mxu0 0.0
    %454 = vmatpush1.msra.mxu0 0.0
    %455 = vmatprep.subr.mxu0 0.0
    %456 = vmatpush1.msra.mxu0 0.0
    %457 = vmatprep.subr.mxu0 0.0
    %458 = vmatpush1.msra.mxu0 0.0
    %459 = vmatprep.subr.mxu0 0.0
    %460 = vmatpush1.msra.mxu0 0.0
    %461 = vmatprep.mubr.f32.mxu0 0.0
    %462 = vmatmul.mubr.f32.gmra.mrb[0].mxu0 %v383
    %v463 = vpop.f32.mrb[0].mxu0
    %v464 = vadd.f32 %v379, %v463
    %v465 = vpop.f32.mrb[0].mxu0
    %v466 = vadd.f32 %v379, %v465
    %467 = vdwg.mxu0
    %468 = vmatprep.subr.mxu0 %v361
    %469 = vmatpush1.msra.mxu0 %v360
    %470 = vmatprep.subr.mxu0 %v365
    %471 = vmatpush1.msra.mxu0 %v364
    %472 = vmatprep.subr.mxu0 %v369
    %473 = vmatpush1.msra.mxu0 %v368
    %474 = vmatprep.subr.mxu0 %v373
    %475 = vmatpush1.msra.mxu0 %v372
    %476 = vmatprep.subr.mxu0 %v395
    %477 = vmatpush1.msra.mxu0 %v392
    %478 = vmatprep.subr.mxu0 0.0
    %479 = vmatpush1.msra.mxu0 0.0
    %480 = vmatprep.subr.mxu0 0.0
    %481 = vmatpush1.msra.mxu0 0.0
    %482 = vmatprep.subr.mxu0 0.0
    %483 = vmatpush1.msra.mxu0 0.0
    %484 = vmatprep.subr.mxu0 0.0
    %485 = vmatpush1.msra.mxu0 0.0
    %486 = vmatprep.subr.mxu0 0.0
    %487 = vmatpush1.msra.mxu0 0.0
    %488 = vmatprep.subr.mxu0 0.0
    %489 = vmatpush1.msra.mxu0 0.0
    %490 = vmatprep.subr.mxu0 0.0
    %491 = vmatpush1.msra.mxu0 0.0
    %492 = vmatprep.subr.mxu0 0.0
    %493 = vmatpush1.msra.mxu0 0.0
    %494 = vmatprep.subr.mxu0 0.0
    %495 = vmatpush1.msra.mxu0 0.0
    %496 = vmatprep.subr.mxu0 0.0
    %497 = vmatpush1.msra.mxu0 0.0
    %498 = vmatprep.subr.mxu0 0.0
    %499 = vmatpush1.msra.mxu0 0.0
    %500 = vmatprep.subr.mxu0 0.0
    %501 = vmatpush1.msra.mxu0 0.0
    %502 = vmatprep.subr.mxu0 0.0
    %503 = vmatpush1.msra.mxu0 0.0
    %504 = vmatprep.subr.mxu0 0.0
    %505 = vmatpush1.msra.mxu0 0.0
    %506 = vmatprep.subr.mxu0 0.0
    %507 = vmatpush1.msra.mxu0 0.0
    %508 = vmatprep.subr.mxu0 0.0
    %509 = vmatpush1.msra.mxu0 0.0
    %510 = vmatprep.subr.mxu0 0.0
    %511 = vmatpush1.msra.mxu0 0.0
    %512 = vmatprep.subr.mxu0 0.0
    %513 = vmatpush1.msra.mxu0 0.0
    %514 = vmatprep.subr.mxu0 0.0
    %515 = vmatpush1.msra.mxu0 0.0
    %516 = vmatprep.subr.mxu0 0.0
    %517 = vmatpush1.msra.mxu0 0.0
    %518 = vmatprep.subr.mxu0 0.0
    %519 = vmatpush1.msra.mxu0 0.0
    %520 = vmatprep.subr.mxu0 0.0
    %521 = vmatpush1.msra.mxu0 0.0
    %522 = vmatprep.subr.mxu0 0.0
    %523 = vmatpush1.msra.mxu0 0.0
    %524 = vmatprep.subr.mxu0 0.0
    %525 = vmatpush1.msra.mxu0 0.0
    %526 = vmatprep.subr.mxu0 0.0
    %527 = vmatpush1.msra.mxu0 0.0
    %528 = vmatprep.subr.mxu0 0.0
    %529 = vmatpush1.msra.mxu0 0.0
    %530 = vmatprep.subr.mxu0 0.0
    %531 = vmatpush1.msra.mxu0 0.0
    %532 = vmatprep.mubr.f32.mxu0 0.0
    %533 = vmatmul.mubr.f32.gmra.mrb[0].mxu0 %v383
    %v534 = vpop.f32.mrb[0].mxu0
    %v535 = vadd.f32 %v379, %v534
    %v536 = vpop.f32.mrb[0].mxu0
    %v537 = vadd.f32 %v379, %v536
    %538 = vdwg.mxu0
    %vm539 = vcmp.gt.f32.partialorder %v464, 0.0
    %vm540 = vcmp.gt.f32.partialorder %v466, 0.0
    %vm541 = vcmp.gt.f32.partialorder %v535, 0.0
    %vm542 = vcmp.gt.f32.partialorder %v537, 0.0
    %v543 = vmul.f32 %v464, 0.1
    %v544 = vmul.f32 %v466, 0.1
    %v545 = vmul.f32 %v535, 0.1
    %v546 = vmul.f32 %v537, 0.1
    %v547 = vsel %vm539, %v464, %v543
    %v548 = vsel %vm540, %v466, %v544
    %v549 = vsel %vm541, %v535, %v545
    %v550 = vsel %vm542, %v537, %v546
    %v551 = vld [vmem:[%s4] sm:$0xff]
    %v552 = vld [vmem:[%s4 + $0x8] sm:$0xff]
    %v553 = vld [vmem:[%s4 + $0x10] sm:$0xff]
    %v554 = vld [vmem:[%s5] sm:$0xff]
    %v555 = vld [vmem:[%s5 + $0x8] sm:$0xff]
    %v556 = vld [vmem:[%s5 + $0x10] sm:$0xff]
    %558 = vset.pattern.permute.xlu0 0
    %559 = vperm.xlu0 %558, %v554
    %v560 = vpop.permute.xlu0 %559
    %563 = vset.pattern.permute.xlu0 0
    %564 = vperm.xlu0 %563, %v555
    %v565 = vpop.permute.xlu0 %564
    %568 = vset.pattern.permute.xlu0 0
    %569 = vperm.xlu0 %568, %v556
    %v570 = vpop.permute.xlu0 %569
    %vm572 = vcmask 64512
    %v574 = vsel %vm572, %v551, 0
    %v577 = vsel %vm572, %v552, 0
    %v580 = vsel %vm572, %v553, 0
    %582 = vmatprep.subr.mxu0 %v548
    %583 = vmatpush1.msra.mxu0 %v547
    %584 = vmatprep.subr.mxu0 0.0
    %585 = vmatpush1.msra.mxu0 0.0
    %586 = vmatprep.subr.mxu0 0.0
    %587 = vmatpush1.msra.mxu0 0.0
    %588 = vmatprep.subr.mxu0 0.0
    %589 = vmatpush1.msra.mxu0 0.0
    %590 = vmatprep.subr.mxu0 0.0
    %591 = vmatpush1.msra.mxu0 0.0
    %592 = vmatprep.subr.mxu0 0.0
    %593 = vmatpush1.msra.mxu0 0.0
    %594 = vmatprep.subr.mxu0 0.0
    %595 = vmatpush1.msra.mxu0 0.0
    %596 = vmatprep.subr.mxu0 0.0
    %597 = vmatpush1.msra.mxu0 0.0
    %598 = vmatprep.subr.mxu0 0.0
    %599 = vmatpush1.msra.mxu0 0.0
    %600 = vmatprep.subr.mxu0 0.0
    %601 = vmatpush1.msra.mxu0 0.0
    %602 = vmatprep.subr.mxu0 0.0
    %603 = vmatpush1.msra.mxu0 0.0
    %604 = vmatprep.subr.mxu0 0.0
    %605 = vmatpush1.msra.mxu0 0.0
    %606 = vmatprep.subr.mxu0 0.0
    %607 = vmatpush1.msra.mxu0 0.0
    %608 = vmatprep.subr.mxu0 0.0
    %609 = vmatpush1.msra.mxu0 0.0
    %610 = vmatprep.subr.mxu0 0.0
    %611 = vmatpush1.msra.mxu0 0.0
    %612 = vmatprep.subr.mxu0 0.0
    %613 = vmatpush1.msra.mxu0 0.0
    %614 = vmatprep.subr.mxu0 0.0
    %615 = vmatpush1.msra.mxu0 0.0
    %616 = vmatprep.subr.mxu0 0.0
    %617 = vmatpush1.msra.mxu0 0.0
    %618 = vmatprep.subr.mxu0 0.0
    %619 = vmatpush1.msra.mxu0 0.0
    %620 = vmatprep.subr.mxu0 0.0
    %621 = vmatpush1.msra.mxu0 0.0
    %622 = vmatprep.subr.mxu0 0.0
    %623 = vmatpush1.msra.mxu0 0.0
    %624 = vmatprep.subr.mxu0 0.0
    %625 = vmatpush1.msra.mxu0 0.0
    %626 = vmatprep.subr.mxu0 0.0
    %627 = vmatpush1.msra.mxu0 0.0
    %628 = vmatprep.subr.mxu0 0.0
    %629 = vmatpush1.msra.mxu0 0.0
    %630 = vmatprep.subr.mxu0 0.0
    %631 = vmatpush1.msra.mxu0 0.0
    %632 = vmatprep.subr.mxu0 0.0
    %633 = vmatpush1.msra.mxu0 0.0
    %634 = vmatprep.subr.mxu0 0.0
    %635 = vmatpush1.msra.mxu0 0.0
    %636 = vmatprep.subr.mxu0 0.0
    %637 = vmatpush1.msra.mxu0 0.0
    %638 = vmatprep.subr.mxu0 0.0
    %639 = vmatpush1.msra.mxu0 0.0
    %640 = vmatprep.subr.mxu0 0.0
    %641 = vmatpush1.msra.mxu0 0.0
    %642 = vmatprep.subr.mxu0 0.0
    %643 = vmatpush1.msra.mxu0 0.0
    %644 = vmatprep.subr.mxu0 0.0
    %645 = vmatpush1.msra.mxu0 0.0
    %646 = vmatprep.mubr.f32.mxu0 0.0
    %647 = vmatmul.mubr.f32.gmra.mrb[0].mxu0 %v574
    %v648 = vpop.f32.mrb[0].mxu0
    %v649 = vadd.f32 %v560, %v648
    %v650 = vpop.f32.mrb[0].mxu0
    %v651 = vadd.f32 %v560, %v650
    %652 = vmatprep.mubr.f32.mxu0 0.0
    %653 = vmatmul.mubr.f32.gmra.mrb[0].mxu0 %v577
    %v654 = vpop.f32.mrb[0].mxu0
    %v655 = vadd.f32 %v565, %v654
    %v656 = vpop.f32.mrb[0].mxu0
    %v657 = vadd.f32 %v565, %v656
    %658 = vmatprep.mubr.f32.mxu0 0.0
    %659 = vmatmul.mubr.f32.gmra.mrb[0].mxu0 %v580
    %v660 = vpop.f32.mrb[0].mxu0
    %v661 = vadd.f32 %v570, %v660
    %v662 = vpop.f32.mrb[0].mxu0
    %v663 = vadd.f32 %v570, %v662
    %664 = vdwg.mxu0
    %665 = vmatprep.subr.mxu0 %v550
    %666 = vmatpush1.msra.mxu0 %v549
    %667 = vmatprep.subr.mxu0 0.0
    %668 = vmatpush1.msra.mxu0 0.0
    %669 = vmatprep.subr.mxu0 0.0
    %670 = vmatpush1.msra.mxu0 0.0
    %671 = vmatprep.subr.mxu0 0.0
    %672 = vmatpush1.msra.mxu0 0.0
    %673 = vmatprep.subr.mxu0 0.0
    %674 = vmatpush1.msra.mxu0 0.0
    %675 = vmatprep.subr.mxu0 0.0
    %676 = vmatpush1.msra.mxu0 0.0
    %677 = vmatprep.subr.mxu0 0.0
    %678 = vmatpush1.msra.mxu0 0.0
    %679 = vmatprep.subr.mxu0 0.0
    %680 = vmatpush1.msra.mxu0 0.0
    %681 = vmatprep.subr.mxu0 0.0
    %682 = vmatpush1.msra.mxu0 0.0
    %683 = vmatprep.subr.mxu0 0.0
    %684 = vmatpush1.msra.mxu0 0.0
    %685 = vmatprep.subr.mxu0 0.0
    %686 = vmatpush1.msra.mxu0 0.0
    %687 = vmatprep.subr.mxu0 0.0
    %688 = vmatpush1.msra.mxu0 0.0
    %689 = vmatprep.subr.mxu0 0.0
    %690 = vmatpush1.msra.mxu0 0.0
    %691 = vmatprep.subr.mxu0 0.0
    %692 = vmatpush1.msra.mxu0 0.0
    %693 = vmatprep.subr.mxu0 0.0
    %694 = vmatpush1.msra.mxu0 0.0
    %695 = vmatprep.subr.mxu0 0.0
    %696 = vmatpush1.msra.mxu0 0.0
    %697 = vmatprep.subr.mxu0 0.0
    %698 = vmatpush1.msra.mxu0 0.0
    %699 = vmatprep.subr.mxu0 0.0
    %700 = vmatpush1.msra.mxu0 0.0
    %701 = vmatprep.subr.mxu0 0.0
    %702 = vmatpush1.msra.mxu0 0.0
    %703 = vmatprep.subr.mxu0 0.0
    %704 = vmatpush1.msra.mxu0 0.0
    %705 = vmatprep.subr.mxu0 0.0
    %706 = vmatpush1.msra.mxu0 0.0
    %707 = vmatprep.subr.mxu0 0.0
    %708 = vmatpush1.msra.mxu0 0.0
    %709 = vmatprep.subr.mxu0 0.0
    %710 = vmatpush1.msra.mxu0 0.0
    %711 = vmatprep.subr.mxu0 0.0
    %712 = vmatpush1.msra.mxu0 0.0
    %713 = vmatprep.subr.mxu0 0.0
    %714 = vmatpush1.msra.mxu0 0.0
    %715 = vmatprep.subr.mxu0 0.0
    %716 = vmatpush1.msra.mxu0 0.0
    %717 = vmatprep.subr.mxu0 0.0
    %718 = vmatpush1.msra.mxu0 0.0
    %719 = vmatprep.subr.mxu0 0.0
    %720 = vmatpush1.msra.mxu0 0.0
    %721 = vmatprep.subr.mxu0 0.0
    %722 = vmatpush1.msra.mxu0 0.0
    %723 = vmatprep.subr.mxu0 0.0
    %724 = vmatpush1.msra.mxu0 0.0
    %725 = vmatprep.subr.mxu0 0.0
    %726 = vmatpush1.msra.mxu0 0.0
    %727 = vmatprep.subr.mxu0 0.0
    %728 = vmatpush1.msra.mxu0 0.0
    %729 = vmatprep.mubr.f32.mxu0 0.0
    %730 = vmatmul.mubr.f32.gmra.mrb[0].mxu0 %v574
    %v731 = vpop.f32.mrb[0].mxu0
    %v732 = vadd.f32 %v560, %v731
    %v733 = vpop.f32.mrb[0].mxu0
    %v734 = vadd.f32 %v560, %v733
    %735 = vmatprep.mubr.f32.mxu0 0.0
    %736 = vmatmul.mubr.f32.gmra.mrb[0].mxu0 %v577
    %v737 = vpop.f32.mrb[0].mxu0
    %v738 = vadd.f32 %v565, %v737
    %v739 = vpop.f32.mrb[0].mxu0
    %v740 = vadd.f32 %v565, %v739
    %741 = vmatprep.mubr.f32.mxu0 0.0
    %742 = vmatmul.mubr.f32.gmra.mrb[0].mxu0 %v580
    %v743 = vpop.f32.mrb[0].mxu0
    %v744 = vadd.f32 %v570, %v743
    %v745 = vpop.f32.mrb[0].mxu0
    %v746 = vadd.f32 %v570, %v745
    %747 = vdwg.mxu0
    %v748 = vld [vmem:[%s6] sm:$0xff]
    %v749 = vld [vmem:[%s6 + $0x8] sm:$0xff]
    %v750 = vld [vmem:[%s6 + $0x10] sm:$0xff]
    %vm751 = vcmp.gt.f32.partialorder %v748, 0.0
    %vm752 = vcmp.gt.f32.partialorder %v749, 0.0
    %vm753 = vcmp.gt.f32.partialorder %v750, 0.0
    %v754 = vxor.u32 %v649, 2147483648
    %v755 = vxor.u32 %v651, 2147483648
    %v756 = vxor.u32 %v732, 2147483648
    %v757 = vxor.u32 %v734, 2147483648
    %v758 = vxor.u32 %v655, 2147483648
    %v759 = vxor.u32 %v657, 2147483648
    %v760 = vxor.u32 %v738, 2147483648
    %v761 = vxor.u32 %v740, 2147483648
    %v762 = vxor.u32 %v661, 2147483648
    %v763 = vxor.u32 %v663, 2147483648
    %v764 = vxor.u32 %v744, 2147483648
    %v765 = vxor.u32 %v746, 2147483648
    %v766 = vmul.f32 %v754, 1.442695
    %v767 = vpow.pop %v766
    %v768 = vmul.f32 %v755, 1.442695
    %v769 = vpow.pop %v768
    %v770 = vmul.f32 %v756, 1.442695
    %v771 = vpow.pop %v770
    %v772 = vmul.f32 %v757, 1.442695
    %v773 = vpow.pop %v772
    %v774 = vmul.f32 %v758, 1.442695
    %v775 = vpow.pop %v774
    %v776 = vmul.f32 %v759, 1.442695
    %v777 = vpow.pop %v776
    %v778 = vmul.f32 %v760, 1.442695
    %v779 = vpow.pop %v778
    %v780 = vmul.f32 %v761, 1.442695
    %v781 = vpow.pop %v780
    %v782 = vmul.f32 %v762, 1.442695
    %v783 = vpow.pop %v782
    %v784 = vmul.f32 %v763, 1.442695
    %v785 = vpow.pop %v784
    %v786 = vmul.f32 %v764, 1.442695
    %v787 = vpow.pop %v786
    %v788 = vmul.f32 %v765, 1.442695
    %v789 = vpow.pop %v788
    %v790 = vadd.f32 %v767, 1.0
    %v791 = vadd.f32 %v769, 1.0
    %v792 = vadd.f32 %v771, 1.0
    %v793 = vadd.f32 %v773, 1.0
    %v794 = vadd.f32 %v775, 1.0
    %v795 = vadd.f32 %v777, 1.0
    %v796 = vadd.f32 %v779, 1.0
    %v797 = vadd.f32 %v781, 1.0
    %v798 = vadd.f32 %v783, 1.0
    %v799 = vadd.f32 %v785, 1.0
    %v800 = vadd.f32 %v787, 1.0
    %v801 = vadd.f32 %v789, 1.0
    %v802 = vrcp.pop %v790
    %v803 = vmul.f32 1.0, %v802
    %v804 = vrcp.pop %v791
    %v805 = vmul.f32 1.0, %v804
    %v806 = vrcp.pop %v792
    %v807 = vmul.f32 1.0, %v806
    %v808 = vrcp.pop %v793
    %v809 = vmul.f32 1.0, %v808
    %v810 = vrcp.pop %v794
    %v811 = vmul.f32 1.0, %v810
    %v812 = vrcp.pop %v795
    %v813 = vmul.f32 1.0, %v812
    %v814 = vrcp.pop %v796
    %v815 = vmul.f32 1.0, %v814
    %v816 = vrcp.pop %v797
    %v817 = vmul.f32 1.0, %v816
    %v818 = vrcp.pop %v798
    %v819 = vmul.f32 1.0, %v818
    %v820 = vrcp.pop %v799
    %v821 = vmul.f32 1.0, %v820
    %v822 = vrcp.pop %v800
    %v823 = vmul.f32 1.0, %v822
    %v824 = vrcp.pop %v801
    %v825 = vmul.f32 1.0, %v824
    %v826 = vsel %vm751, 1, 0
    %v827 = vsel %vm752, 1, 0
    %v828 = vsel %vm753, 1, 0
    %829 = vset.pattern.permute.xlu0 0
    %830 = vperm.xlu0 %829, %v826
    %v831 = vpop.permute.xlu0 %830
    %832 = vset.pattern.permute.xlu0 0
    %833 = vperm.xlu0 %832, %v827
    %v834 = vpop.permute.xlu0 %833
    %835 = vset.pattern.permute.xlu0 0
    %836 = vperm.xlu0 %835, %v828
    %v837 = vpop.permute.xlu0 %836
    %vm838 = vcmp.eq.s32.totalorder %v831, 1
    %vm839 = vcmp.eq.s32.totalorder %v834, 1
    %vm840 = vcmp.eq.s32.totalorder %v837, 1
    %v841 = vsel %vm838, %v803, %v649
    %v842 = vsel %vm838, %v805, %v651
    %v843 = vsel %vm838, %v807, %v732
    %v844 = vsel %vm838, %v809, %v734
    %v845 = vsel %vm839, %v811, %v655
    %v846 = vsel %vm839, %v813, %v657
    %v847 = vsel %vm839, %v815, %v738
    %v848 = vsel %vm839, %v817, %v740
    %v849 = vsel %vm840, %v819, %v661
    %v850 = vsel %vm840, %v821, %v663
    %v851 = vsel %vm840, %v823, %v744
    %v852 = vsel %vm840, %v825, %v746
    %853 = vst [vmem:[#allocation2] sm:$0xff] %v841
    %854 = vst [vmem:[#allocation2 + $0x8] sm:$0xff] %v842
    %855 = vst [vmem:[#allocation2 + $0x10] sm:$0xff] %v843
    %856 = vst [vmem:[#allocation2 + $0x18] sm:$0xff] %v844
    %857 = vst [vmem:[#allocation2 + $0x20] sm:$0xff] %v845
    %858 = vst [vmem:[#allocation2 + $0x28] sm:$0xff] %v846
    %859 = vst [vmem:[#allocation2 + $0x30] sm:$0xff] %v847
    %860 = vst [vmem:[#allocation2 + $0x38] sm:$0xff] %v848
    %861 = vst [vmem:[#allocation2 + $0x40] sm:$0xff] %v849
    %862 = vst [vmem:[#allocation2 + $0x48] sm:$0xff] %v850
    %863 = vst [vmem:[#allocation2 + $0x50] sm:$0xff] %v851
    %864 = vst [vmem:[#allocation2 + $0x58] sm:$0xff] %v852
    // Predicated region
    $region30: #{tpu_custom_call.1} parent=1 // pred_check
      _
    $region31: #{tpu_custom_call.1} parent=1 // pred_check_branch
      %866 = sbr.rel (0) target = $region33
    $region32: #{tpu_custom_call.1} parent=1 // pred_region
      %s868 = ssub.s32 1536, 1536
      %869 = vsyncadd [#allocation3], %s868
      %s870 = sshll.u32 [#allocation2], 4
      %s871 = int_to_ptr.vmem [resolvable:$true] %s870
      %876 = dma.vmem_to_hbm [thread:$0]  %s871, 1536, %s7, [#allocation3], 512, 512, 32
    $region33: #{tpu_custom_call.1} parent=1 // pred_fallthru
      _
    // Predicated region
    $region34: #{tpu_custom_call.1} parent=1 // pred_check
      _
    $region35: #{tpu_custom_call.1} parent=1 // pred_check_branch
      %878 = sbr.rel (0) target = $region37
    $region36: #{tpu_custom_call.1} parent=1 // pred_region
      %879 = dma.done [#allocation3], 1536
    $region37: #{tpu_custom_call.1} parent=1 // pred_fallthru
      _
    %880 = vsyncpa [#allocation3], 1

</llo_original>
